<compile_context>
chip_gen: v5e
topology: v5e:2x2
jax: 0.10.0
libtpu: 0.0.40
codegen_flags: <defaults>
</compile_context>

<pallas_src>
import functools
import math

import numpy as np
import jax
import jax.numpy as jnp
from jax.experimental import pallas as pl
from jax.experimental.pallas import tpu as pltpu  # noqa: F401  (TPU backend; kept for tuning hooks)


# ---------------------------------------------------------------------------
# Host-side buffer setup (mirrors Rotation.__init__'s wgt_cst construction).
# grid_sample with a *fixed* grid is a linear map over the flattened spatial
# axis, so wgt_cst is materialized as a (k*k, k*k) sampling matrix S with
# out_flat = S @ in_flat, per (n, c) plane.  Returned as NUMPY (never cache
# jnp values created under a jit trace).
# ---------------------------------------------------------------------------
def _affine_rot_grid(theta, ksize):
    """F.affine_grid(rot(theta), (1,1,k,k), align_corners=True) -> (k, k, 2)."""
    ct, sn = math.cos(theta), math.sin(theta)
    xs = np.linspace(-1.0, 1.0, ksize)   # width  (x) coord, align_corners=True
    ys = np.linspace(-1.0, 1.0, ksize)   # height (y) coord
    Y, X = np.meshgrid(ys, xs, indexing="ij")
    gx = ct * X - sn * Y
    gy = sn * X + ct * Y
    return np.stack([gx, gy], axis=-1)   # (..., 0)=x, (..., 1)=y


def _grid_sample_matrix(grid, h_in, w_in):
    """Bilinear grid_sample (align_corners=True, zeros padding) as a linear map."""
    h_out, w_out, _ = grid.shape
    S = np.zeros((h_out * w_out, h_in * w_in), dtype=np.float64)
    for i in range(h_out):
        for j in range(w_out):
            gx, gy = grid[i, j]
            ix = (gx + 1.0) * 0.5 * (w_in - 1)
            iy = (gy + 1.0) * 0.5 * (h_in - 1)
            ix0, iy0 = int(np.floor(ix)), int(np.floor(iy))
            wx1, wy1 = ix - ix0, iy - iy0
            for yy, wy in ((iy0, 1.0 - wy1), (iy0 + 1, wy1)):
                for xx, wx in ((ix0, 1.0 - wx1), (ix0 + 1, wx1)):
                    if 0 <= xx < w_in and 0 <= yy < h_in:
                        S[i * w_out + j, yy * w_in + xx] += wy * wx
    return S.astype(np.float32)


@functools.lru_cache(maxsize=None)
def _sampling_matrix(channels, ksize):
    """Cached constant (k*k, k*k) numpy sampling matrix for the wgt_cst buffer."""
    theta_cst = (channels - 1) * math.pi / channels   # theta selected at i == channels - 1
    grid = _affine_rot_grid(theta_cst, ksize)
    return _grid_sample_matrix(grid, ksize, ksize)    # numpy float32 -- cache-safe


def _round_up(v, m):
    return ((v + m - 1) // m) * m


# ---------------------------------------------------------------------------
# Pallas kernel.
#   x_ref: (HW, Rp) f32 -- spatial (k*k) on sublanes, padded C*N on lanes.
#          Column layout: [first-half channels (c*N+n) | zeros | second-half
#          channels | zeros], each half padded to Rp/2 (a 128 multiple).
#   o_ref: (1, 1) f32   -- scalar loss.
#   s_np / r_true are baked compile-time constants (sampling matrix, true
#   unpadded column count).
# ---------------------------------------------------------------------------
def _rotation_kernel(x_ref, o_ref, *, s_np, r_true):
    x = x_ref[...]
    hw, rp = x.shape
    half = rp // 2        # 128-aligned by construction -> free lane view

    # losSTD: per-(n,c) unbiased std over the spatial axis (two-pass, stable),
    # then mean over the TRUE (unpadded) number of columns.  Padded columns are
    # all-zero -> std == 0 -> contribute nothing to the sum.
    mean = jnp.sum(x, axis=0, keepdims=True) * (1.0 / hw)          # (1, Rp)
    cen = x - mean
    var = jnp.sum(cen * cen, axis=0, keepdims=True) * (1.0 / (hw - 1))
    std = jnp.sqrt(var)                                            # (1, Rp)
    mean_std = jnp.sum(std, axis=1, keepdims=True) * (1.0 / r_true)  # (1, 1)
    los_std = jnp.maximum(-mean_std, -0.5) * 8.0 + 4.0              # (1, 1)

    # cst = grid_sample(raw, wgt_cst): fixed linear map S over the spatial
    # axis.  Unrolled as exact-f32 VPU FMAs over the baked constants (at most
    # 4 nonzero bilinear taps per output pixel); accumulate ||x*cst||^2
    # row-by-row without materializing cst.
    rows = [x[q:q + 1, :] for q in range(hw)]                      # (1, Rp) each
    ss_cst_row = jnp.zeros((1, rp), jnp.float32)
    for p in range(hw):
        acc = jnp.zeros((1, rp), jnp.float32)
        for q in range(hw):
            w = float(s_np[p, q])
            if w != 0.0:
                acc = acc + w * rows[q]
        pc = rows[p] * acc
        ss_cst_row = ss_cst_row + pc * pc
    ss_cst = jnp.sum(ss_cst_row, axis=1, keepdims=True)            # (1, 1)

    # dis = channel-half swap. With channel-major columns and per-half padding,
    # ||raw * dis||^2 == 2 * ||a * b||^2 where a/b are the two lane halves
    # (padded columns give 0 * 0 = 0).
    a = x[:, :half]
    b = x[:, half:]
    po = a * b
    ss_oth = 2.0 * jnp.sum(jnp.sum(po * po, axis=0, keepdims=True),
                           axis=1, keepdims=True)                  # (1, 1)

    res_cst = jnp.sqrt(ss_cst)
    res_oth = jnp.sqrt(ss_oth)
    los_oth = res_oth / (res_cst + res_oth + 1e-6)

    o_ref[...] = (los_oth + los_std).astype(jnp.float32)


# ---------------------------------------------------------------------------
# Jitted wrapper: transpose/pad + pallas_call + scalar extraction fuse into a
# single dispatch; the sampling matrix is a compiled-in numpy constant.
# ---------------------------------------------------------------------------
@functools.partial(jax.jit, static_argnames=("channels", "ksize"))
def rotation_forward(raw, channels=16, ksize=3):
    """raw: (N, C, k, k) float32, with N == channels and spatial == ksize."""
    N, C, H, W = raw.shape
    assert N == channels, "grid_sample requires raw batch == module channels"
    assert H == ksize and W == ksize, "spatial dims must equal ksize"
    assert C % 2 == 0, "channel dim must be even for the half-swap"
    HW = H * W
    half_true = (C // 2) * N
    r_true = C * N
    half_pad = _round_up(half_true, 128)     # 128-align each channel half
    rp = 2 * half_pad

    # Layout: (N,C,H,W) -> (H,W,C,N) -> (HW, C, N); split the channel halves,
    # flatten each to (HW, half_true) with col = c*N + n, zero-pad each half to
    # a 128 multiple, then concat -> lane-dense (HW, Rp).
    x = jnp.transpose(raw, (2, 3, 1, 0)).astype(jnp.float32).reshape(HW, C, N)
    a = x[:, : C // 2, :].reshape(HW, half_true)
    b = x[:, C // 2:, :].reshape(HW, half_true)
    pad = half_pad - half_true
    if pad:
        z = jnp.zeros((HW, pad), jnp.float32)
        a = jnp.concatenate([a, z], axis=1)
        b = jnp.concatenate([b, z], axis=1)
    x_t = jnp.concatenate([a, b], axis=1)                          # (HW, Rp)

    s_np = _sampling_matrix(channels, ksize)                       # numpy constant
    nnz = int(np.count_nonzero(s_np))

    kernel = functools.partial(_rotation_kernel, s_np=s_np, r_true=r_true)
    cost = pl.CostEstimate(
        flops=2 * nnz * rp + 14 * HW * rp,
        transcendentals=rp + 4,
        bytes_accessed=HW * rp * 4 + 4,
    )

    out2d = pl.pallas_call(
        kernel,
        out_shape=jax.ShapeDtypeStruct((1, 1), jnp.float32),
        in_specs=[pl.BlockSpec((HW, rp), lambda: (0, 0))],
        out_specs=pl.BlockSpec((1, 1), lambda: (0, 0)),
        cost_estimate=cost,
    )(x_t)
    return out2d[0, 0]


# ---------------------------------------------------------------------------
# Plain-JAX reference in the original NCHW layout (independent of the kernel's
# transposed/padded layout and half-swap identity) for a silent sanity check.
# ---------------------------------------------------------------------------
def _reference(raw, channels, ksize):
    N, C, H, W = raw.shape
    x = raw.reshape(N, C, H * W).astype(jnp.float32)
    std = jnp.std(x, axis=-1, ddof=1)
    los_std = jnp.maximum(-jnp.mean(std), -0.5) * 8.0 + 4.0
    S = jnp.asarray(_sampling_matrix(channels, ksize))             # numpy -> jnp (outside jit)
    cst = jnp.einsum("pq,ncq->ncp", S, x, precision=jax.lax.Precision.HIGHEST)
    half_c = C // 2
    dis = jnp.concatenate([x[:, half_c:], x[:, :half_c]], axis=1)
    res_cst = jnp.linalg.norm(x * cst)
    res_oth = jnp.linalg.norm(x * dis)
    return res_oth / (res_cst + res_oth + 1e-6) + los_std


if __name__ == "__main__":
    channels = 8      # Rotation(channels=8, ksize=3); batch must equal channels
    ksize = 3
    c_raw = 4         # channels of the input feature map (even)

    key = jax.random.PRNGKey(0)
    raw = jax.random.normal(key, (channels, c_raw, ksize, ksize), dtype=jnp.float32)

    out = rotation_forward(raw, channels=channels, ksize=ksize)
    out = jax.block_until_ready(out)

    ref = _reference(raw, channels, ksize)
    np.testing.assert_allclose(np.asarray(out), np.asarray(ref), rtol=1e-5, atol=1e-5)

    print("KERNEL_OK")
</pallas_src>

<mosaic_0001>
module attributes {stable_mosaic.version = 11 : i64} {
  func.func @_rotation_kernel(%arg0: memref<9x256xf32, #tpu.memory_space<vmem>>, %arg1: memref<1x1xf32, #tpu.memory_space<vmem>>) attributes {dimension_semantics = [], scalar_prefetch = 0 : i64, scratch_operands = 0 : i64, tpu.core_type = #tpu.core_type<tc>} {
    %c0 = arith.constant 0 : index
    %c0_0 = arith.constant 0 : index
    %0 = vector.load %arg0[%c0, %c0_0] : memref<9x256xf32, #tpu.memory_space<vmem>>, vector<9x256xf32>
    %cst = arith.constant dense<0.000000e+00> : vector<256xf32>
    %1 = vector.multi_reduction <add>, %0, %cst [0] : vector<9x256xf32> to vector<256xf32>
    %2 = vector.shape_cast %1 : vector<256xf32> to vector<1x256xf32>
    %cst_1 = arith.constant 0.111111112 : f32
    %3 = vector.broadcast %cst_1 : f32 to vector<1x256xf32>
    %4 = arith.mulf %2, %3 : vector<1x256xf32>
    %5 = vector.broadcast %4 : vector<1x256xf32> to vector<9x256xf32>
    %6 = arith.subf %0, %5 : vector<9x256xf32>
    %7 = arith.mulf %6, %6 : vector<9x256xf32>
    %cst_2 = arith.constant dense<0.000000e+00> : vector<256xf32>
    %8 = vector.multi_reduction <add>, %7, %cst_2 [0] : vector<9x256xf32> to vector<256xf32>
    %9 = vector.shape_cast %8 : vector<256xf32> to vector<1x256xf32>
    %cst_3 = arith.constant 1.250000e-01 : f32
    %10 = vector.broadcast %cst_3 : f32 to vector<1x256xf32>
    %11 = arith.mulf %9, %10 : vector<1x256xf32>
    %12 = math.sqrt %11 : vector<1x256xf32>
    %cst_4 = arith.constant dense<0.000000e+00> : vector<1xf32>
    %13 = vector.multi_reduction <add>, %12, %cst_4 [1] : vector<1x256xf32> to vector<1xf32>
    %14 = vector.shape_cast %13 : vector<1xf32> to vector<1x1xf32>
    %cst_5 = arith.constant 3.125000e-02 : f32
    %15 = vector.broadcast %cst_5 : f32 to vector<1x1xf32>
    %16 = arith.mulf %14, %15 : vector<1x1xf32>
    %cst_6 = arith.constant 0.000000e+00 : f32
    %17 = vector.broadcast %cst_6 : f32 to vector<1x1xf32>
    %18 = arith.subf %17, %16 : vector<1x1xf32>
    %cst_7 = arith.constant -5.000000e-01 : f32
    %19 = vector.broadcast %cst_7 : f32 to vector<1x1xf32>
    %20 = arith.maximumf %18, %19 : vector<1x1xf32>
    %cst_8 = arith.constant 8.000000e+00 : f32
    %21 = vector.broadcast %cst_8 : f32 to vector<1x1xf32>
    %22 = arith.mulf %20, %21 : vector<1x1xf32>
    %cst_9 = arith.constant 4.000000e+00 : f32
    %23 = vector.broadcast %cst_9 : f32 to vector<1x1xf32>
    %24 = arith.addf %22, %23 : vector<1x1xf32>
    %25 = vector.extract_strided_slice %0 {offsets = [0, 0], sizes = [1, 256], strides = [1, 1]} : vector<9x256xf32> to vector<1x256xf32>
    %26 = vector.extract_strided_slice %0 {offsets = [1, 0], sizes = [1, 256], strides = [1, 1]} : vector<9x256xf32> to vector<1x256xf32>
    %27 = vector.extract_strided_slice %0 {offsets = [2, 0], sizes = [1, 256], strides = [1, 1]} : vector<9x256xf32> to vector<1x256xf32>
    %28 = vector.extract_strided_slice %0 {offsets = [3, 0], sizes = [1, 256], strides = [1, 1]} : vector<9x256xf32> to vector<1x256xf32>
    %29 = vector.extract_strided_slice %0 {offsets = [4, 0], sizes = [1, 256], strides = [1, 1]} : vector<9x256xf32> to vector<1x256xf32>
    %30 = vector.extract_strided_slice %0 {offsets = [5, 0], sizes = [1, 256], strides = [1, 1]} : vector<9x256xf32> to vector<1x256xf32>
    %31 = vector.extract_strided_slice %0 {offsets = [6, 0], sizes = [1, 256], strides = [1, 1]} : vector<9x256xf32> to vector<1x256xf32>
    %32 = vector.extract_strided_slice %0 {offsets = [7, 0], sizes = [1, 256], strides = [1, 1]} : vector<9x256xf32> to vector<1x256xf32>
    %33 = vector.extract_strided_slice %0 {offsets = [8, 0], sizes = [1, 256], strides = [1, 1]} : vector<9x256xf32> to vector<1x256xf32>
    %cst_10 = arith.constant 0.000000e+00 : f32
    %34 = vector.broadcast %cst_10 : f32 to vector<1x256xf32>
    %cst_11 = arith.constant 0.000000e+00 : f32
    %35 = vector.broadcast %cst_11 : f32 to vector<1x256xf32>
    %cst_12 = arith.constant 0.318151623 : f32
    %36 = vector.broadcast %cst_12 : f32 to vector<1x256xf32>
    %37 = arith.mulf %36, %30 : vector<1x256xf32>
    %38 = arith.addf %35, %37 : vector<1x256xf32>
    %cst_13 = arith.constant 0.375285417 : f32
    %39 = vector.broadcast %cst_13 : f32 to vector<1x256xf32>
    %40 = arith.mulf %39, %33 : vector<1x256xf32>
    %41 = arith.addf %38, %40 : vector<1x256xf32>
    %42 = arith.mulf %25, %41 : vector<1x256xf32>
    %43 = arith.mulf %42, %42 : vector<1x256xf32>
    %44 = arith.addf %34, %43 : vector<1x256xf32>
    %cst_14 = arith.constant 0.000000e+00 : f32
    %45 = vector.broadcast %cst_14 : f32 to vector<1x256xf32>
    %cst_15 = arith.constant 0.0469904244 : f32
    %46 = vector.broadcast %cst_15 : f32 to vector<1x256xf32>
    %47 = arith.mulf %46, %29 : vector<1x256xf32>
    %48 = arith.addf %45, %47 : vector<1x256xf32>
    %cst_16 = arith.constant 0.0291300416 : f32
    %49 = vector.broadcast %cst_16 : f32 to vector<1x256xf32>
    %50 = arith.mulf %49, %30 : vector<1x256xf32>
    %51 = arith.addf %48, %50 : vector<1x256xf32>
    %cst_17 = arith.constant 0.570326149 : f32
    %52 = vector.broadcast %cst_17 : f32 to vector<1x256xf32>
    %53 = arith.mulf %52, %32 : vector<1x256xf32>
    %54 = arith.addf %51, %53 : vector<1x256xf32>
    %cst_18 = arith.constant 0.353553385 : f32
    %55 = vector.broadcast %cst_18 : f32 to vector<1x256xf32>
    %56 = arith.mulf %55, %33 : vector<1x256xf32>
    %57 = arith.addf %54, %56 : vector<1x256xf32>
    %58 = arith.mulf %26, %57 : vector<1x256xf32>
    %59 = arith.mulf %58, %58 : vector<1x256xf32>
    %60 = arith.addf %44, %59 : vector<1x256xf32>
    %cst_19 = arith.constant 0.000000e+00 : f32
    %61 = vector.broadcast %cst_19 : f32 to vector<1x256xf32>
    %cst_20 = arith.constant 0.375285417 : f32
    %62 = vector.broadcast %cst_20 : f32 to vector<1x256xf32>
    %63 = arith.mulf %62, %31 : vector<1x256xf32>
    %64 = arith.addf %61, %63 : vector<1x256xf32>
    %cst_21 = arith.constant 0.318151623 : f32
    %65 = vector.broadcast %cst_21 : f32 to vector<1x256xf32>
    %66 = arith.mulf %65, %32 : vector<1x256xf32>
    %67 = arith.addf %64, %66 : vector<1x256xf32>
    %68 = arith.mulf %27, %67 : vector<1x256xf32>
    %69 = arith.mulf %68, %68 : vector<1x256xf32>
    %70 = arith.addf %60, %69 : vector<1x256xf32>
    %cst_22 = arith.constant 0.000000e+00 : f32
    %71 = vector.broadcast %cst_22 : f32 to vector<1x256xf32>
    %cst_23 = arith.constant 0.0291300416 : f32
    %72 = vector.broadcast %cst_23 : f32 to vector<1x256xf32>
    %73 = arith.mulf %72, %26 : vector<1x256xf32>
    %74 = arith.addf %71, %73 : vector<1x256xf32>
    %cst_24 = arith.constant 0.353553385 : f32
    %75 = vector.broadcast %cst_24 : f32 to vector<1x256xf32>
    %76 = arith.mulf %75, %27 : vector<1x256xf32>
    %77 = arith.addf %74, %76 : vector<1x256xf32>
    %cst_25 = arith.constant 0.0469904244 : f32
    %78 = vector.broadcast %cst_25 : f32 to vector<1x256xf32>
    %79 = arith.mulf %78, %29 : vector<1x256xf32>
    %80 = arith.addf %77, %79 : vector<1x256xf32>
    %cst_26 = arith.constant 0.570326149 : f32
    %81 = vector.broadcast %cst_26 : f32 to vector<1x256xf32>
    %82 = arith.mulf %81, %30 : vector<1x256xf32>
    %83 = arith.addf %80, %82 : vector<1x256xf32>
    %84 = arith.mulf %28, %83 : vector<1x256xf32>
    %85 = arith.mulf %84, %84 : vector<1x256xf32>
    %86 = arith.addf %70, %85 : vector<1x256xf32>
    %cst_27 = arith.constant 0.000000e+00 : f32
    %87 = vector.broadcast %cst_27 : f32 to vector<1x256xf32>
    %cst_28 = arith.constant 1.000000e+00 : f32
    %88 = vector.broadcast %cst_28 : f32 to vector<1x256xf32>
    %89 = arith.mulf %88, %29 : vector<1x256xf32>
    %90 = arith.addf %87, %89 : vector<1x256xf32>
    %91 = arith.mulf %29, %90 : vector<1x256xf32>
    %92 = arith.mulf %91, %91 : vector<1x256xf32>
    %93 = arith.addf %86, %92 : vector<1x256xf32>
    %cst_29 = arith.constant 0.000000e+00 : f32
    %94 = vector.broadcast %cst_29 : f32 to vector<1x256xf32>
    %cst_30 = arith.constant 0.570326149 : f32
    %95 = vector.broadcast %cst_30 : f32 to vector<1x256xf32>
    %96 = arith.mulf %95, %28 : vector<1x256xf32>
    %97 = arith.addf %94, %96 : vector<1x256xf32>
    %cst_31 = arith.constant 0.0469904244 : f32
    %98 = vector.broadcast %cst_31 : f32 to vector<1x256xf32>
    %99 = arith.mulf %98, %29 : vector<1x256xf32>
    %100 = arith.addf %97, %99 : vector<1x256xf32>
    %cst_32 = arith.constant 0.353553385 : f32
    %101 = vector.broadcast %cst_32 : f32 to vector<1x256xf32>
    %102 = arith.mulf %101, %31 : vector<1x256xf32>
    %103 = arith.addf %100, %102 : vector<1x256xf32>
    %cst_33 = arith.constant 0.0291300416 : f32
    %104 = vector.broadcast %cst_33 : f32 to vector<1x256xf32>
    %105 = arith.mulf %104, %32 : vector<1x256xf32>
    %106 = arith.addf %103, %105 : vector<1x256xf32>
    %107 = arith.mulf %30, %106 : vector<1x256xf32>
    %108 = arith.mulf %107, %107 : vector<1x256xf32>
    %109 = arith.addf %93, %108 : vector<1x256xf32>
    %cst_34 = arith.constant 0.000000e+00 : f32
    %110 = vector.broadcast %cst_34 : f32 to vector<1x256xf32>
    %cst_35 = arith.constant 0.318151623 : f32
    %111 = vector.broadcast %cst_35 : f32 to vector<1x256xf32>
    %112 = arith.mulf %111, %26 : vector<1x256xf32>
    %113 = arith.addf %110, %112 : vector<1x256xf32>
    %cst_36 = arith.constant 0.375285417 : f32
    %114 = vector.broadcast %cst_36 : f32 to vector<1x256xf32>
    %115 = arith.mulf %114, %27 : vector<1x256xf32>
    %116 = arith.addf %113, %115 : vector<1x256xf32>
    %117 = arith.mulf %31, %116 : vector<1x256xf32>
    %118 = arith.mulf %117, %117 : vector<1x256xf32>
    %119 = arith.addf %109, %118 : vector<1x256xf32>
    %cst_37 = arith.constant 0.000000e+00 : f32
    %120 = vector.broadcast %cst_37 : f32 to vector<1x256xf32>
    %cst_38 = arith.constant 0.353553385 : f32
    %121 = vector.broadcast %cst_38 : f32 to vector<1x256xf32>
    %122 = arith.mulf %121, %25 : vector<1x256xf32>
    %123 = arith.addf %120, %122 : vector<1x256xf32>
    %cst_39 = arith.constant 0.570326149 : f32
    %124 = vector.broadcast %cst_39 : f32 to vector<1x256xf32>
    %125 = arith.mulf %124, %26 : vector<1x256xf32>
    %126 = arith.addf %123, %125 : vector<1x256xf32>
    %cst_40 = arith.constant 0.0291300416 : f32
    %127 = vector.broadcast %cst_40 : f32 to vector<1x256xf32>
    %128 = arith.mulf %127, %28 : vector<1x256xf32>
    %129 = arith.addf %126, %128 : vector<1x256xf32>
    %cst_41 = arith.constant 0.0469904244 : f32
    %130 = vector.broadcast %cst_41 : f32 to vector<1x256xf32>
    %131 = arith.mulf %130, %29 : vector<1x256xf32>
    %132 = arith.addf %129, %131 : vector<1x256xf32>
    %133 = arith.mulf %32, %132 : vector<1x256xf32>
    %134 = arith.mulf %133, %133 : vector<1x256xf32>
    %135 = arith.addf %119, %134 : vector<1x256xf32>
    %cst_42 = arith.constant 0.000000e+00 : f32
    %136 = vector.broadcast %cst_42 : f32 to vector<1x256xf32>
    %cst_43 = arith.constant 0.375285417 : f32
    %137 = vector.broadcast %cst_43 : f32 to vector<1x256xf32>
    %138 = arith.mulf %137, %25 : vector<1x256xf32>
    %139 = arith.addf %136, %138 : vector<1x256xf32>
    %cst_44 = arith.constant 0.318151623 : f32
    %140 = vector.broadcast %cst_44 : f32 to vector<1x256xf32>
    %141 = arith.mulf %140, %28 : vector<1x256xf32>
    %142 = arith.addf %139, %141 : vector<1x256xf32>
    %143 = arith.mulf %33, %142 : vector<1x256xf32>
    %144 = arith.mulf %143, %143 : vector<1x256xf32>
    %145 = arith.addf %135, %144 : vector<1x256xf32>
    %cst_45 = arith.constant dense<0.000000e+00> : vector<1xf32>
    %146 = vector.multi_reduction <add>, %145, %cst_45 [1] : vector<1x256xf32> to vector<1xf32>
    %147 = vector.shape_cast %146 : vector<1xf32> to vector<1x1xf32>
    %148 = vector.extract_strided_slice %0 {offsets = [0, 0], sizes = [9, 128], strides = [1, 1]} : vector<9x256xf32> to vector<9x128xf32>
    %149 = vector.extract_strided_slice %0 {offsets = [0, 128], sizes = [9, 128], strides = [1, 1]} : vector<9x256xf32> to vector<9x128xf32>
    %150 = arith.mulf %148, %149 : vector<9x128xf32>
    %151 = arith.mulf %150, %150 : vector<9x128xf32>
    %cst_46 = arith.constant dense<0.000000e+00> : vector<128xf32>
    %152 = vector.multi_reduction <add>, %151, %cst_46 [0] : vector<9x128xf32> to vector<128xf32>
    %153 = vector.shape_cast %152 : vector<128xf32> to vector<1x128xf32>
    %cst_47 = arith.constant dense<0.000000e+00> : vector<1xf32>
    %154 = vector.multi_reduction <add>, %153, %cst_47 [1] : vector<1x128xf32> to vector<1xf32>
    %155 = vector.shape_cast %154 : vector<1xf32> to vector<1x1xf32>
    %cst_48 = arith.constant 2.000000e+00 : f32
    %156 = vector.broadcast %cst_48 : f32 to vector<1x1xf32>
    %157 = arith.mulf %156, %155 : vector<1x1xf32>
    %158 = math.sqrt %147 : vector<1x1xf32>
    %159 = math.sqrt %157 : vector<1x1xf32>
    %160 = arith.addf %158, %159 : vector<1x1xf32>
    %cst_49 = arith.constant 9.99999997E-7 : f32
    %161 = vector.broadcast %cst_49 : f32 to vector<1x1xf32>
    %162 = arith.addf %160, %161 : vector<1x1xf32>
    %163 = arith.divf %159, %162 : vector<1x1xf32>
    %164 = arith.addf %163, %24 : vector<1x1xf32>
    %c0_50 = arith.constant 0 : index
    %c0_51 = arith.constant 0 : index
    %165 = vector.load %arg1[%c0_50, %c0_51] : memref<1x1xf32, #tpu.memory_space<vmem>>, vector<1x1xf32>
    tpu.vector_store %arg1[%c0_50, %c0_51], %164 {strides = array<i32>} : memref<1x1xf32, #tpu.memory_space<vmem>>, vector<1x1xf32>,
    return
  }
}

</mosaic_0001>

<llo_original>
// kernel: rotation_forward.1
$region0: #{rotation_forward.1}
  #allocation0 [shape = 'u32[]', space=smem, size = 0x4, offset = 0x4, fixed_abs, tag = 'smem constant byte address 0x4 - core index']
  #allocation1 [shape = 'u32[72,128]{1,0:T(1,128)}', space=vmem, size = 0x9000, scoped, tag = 'internal scratch']
  %s0 = inlined_call_operand.vmem [shape: f32[9,256], index: 0, kind: input, shape index: {}]
  %s1 = inlined_call_operand.hbm [shape: f32[1,1], index: 1, kind: output, shape index: {}]
  %s2 = sld [smem:[#allocation0]]
  $region14: #{rotation_forward.1} parent=0
    _
  %s4 = ssub.s32 1, %s2
  %s5 = scalar_select 0, %s4, %s2
  $region1: #{rotation_forward.1} parent=0
    #allocation2 [shape = 'u8[512]{0}', space=vmem, size = 0x400, scoped, tag = 'output window, operand 0, single buffered']
    #allocation3 [shape = 's32[1]{0}', space=sflag, size = 0x4, scoped, tag = 'scoped memory for rotation_forward.1']
    %6 = vsyncpa [#allocation3], 0
    // Predicated region
    $region2: #{rotation_forward.1} parent=1 // pred_check
      _
    $region3: #{rotation_forward.1} parent=1 // pred_check_branch
      %8 = sbr.rel (0) target = $region5
    $region4: #{rotation_forward.1} parent=1 // pred_region
      _
    $region5: #{rotation_forward.1} parent=1 // pred_fallthru
      _
    %v9 = vld [vmem:[%s0] sm:$0xff]
    %v10 = vld [vmem:[%s0 + $0x8] sm:$0xff]
    %v11 = vld [vmem:[%s0 + $0x10] sm:$0x1]
    %v12 = vld [vmem:[%s0 + $0x18] sm:$0x1]
    %vm13 = vcmask 1040384
    %v14 = vsel %vm13, %v11, 0.0
    %v15 = vadd.f32 %v9, %v14
    %v16 = vrot.slane %v15, 4
    %v17 = vadd.f32 %v15, %v16
    %v18 = vrot.slane %v17, 2
    %v19 = vadd.f32 %v17, %v18
    %v20 = vrot.slane %v19, 1
    %v21 = vadd.f32 %v19, %v20
    %v22 = vsel %vm13, %v12, 0.0
    %v23 = vadd.f32 %v10, %v22
    %v24 = vrot.slane %v23, 4
    %v25 = vadd.f32 %v23, %v24
    %v26 = vrot.slane %v25, 2
    %v27 = vadd.f32 %v25, %v26
    %v28 = vrot.slane %v27, 1
    %v29 = vadd.f32 %v27, %v28
    %v30 = vmul.f32 %v21, 0.11111111
    %v31 = vmul.f32 %v29, 0.11111111
    %v32 = vsub.f32 %v9, %v30
    %v33 = vsub.f32 %v10, %v31
    %v34 = vsub.f32 %v11, %v30
    %v35 = vsub.f32 %v12, %v31
    %v36 = vmul.f32 %v32, %v32
    %v37 = vmul.f32 %v33, %v33
    %v38 = vmul.f32 %v34, %v34
    %v39 = vmul.f32 %v35, %v35
    %v40 = vsel %vm13, %v38, 0.0
    %v41 = vadd.f32 %v36, %v40
    %v42 = vrot.slane %v41, 4
    %v43 = vadd.f32 %v41, %v42
    %v44 = vrot.slane %v43, 2
    %v45 = vadd.f32 %v43, %v44
    %v46 = vrot.slane %v45, 1
    %v47 = vadd.f32 %v45, %v46
    %v48 = vsel %vm13, %v39, 0.0
    %v49 = vadd.f32 %v37, %v48
    %v50 = vrot.slane %v49, 4
    %v51 = vadd.f32 %v49, %v50
    %v52 = vrot.slane %v51, 2
    %v53 = vadd.f32 %v51, %v52
    %v54 = vrot.slane %v53, 1
    %v55 = vadd.f32 %v53, %v54
    %v56 = vmul.f32 %v47, 0.125
    %v57 = vmul.f32 %v55, 0.125
    %v58 = vrsqrt.pop %v56
    %v59 = vmul.f32 %v58, %v56
    %v60 = vmul.f32 %v59, %v58
    %v61 = vmul.f32 0.5, %v60
    %v62 = vsub.f32 1.5, %v61
    %v63 = vmul.f32 %v58, %v62
    %v64 = vmul.f32 %v56, %v63
    %vm65 = vcmp.eq.f32.partialorder %v56, inf
    %v66 = vsel %vm65, %v56, %v64
    %vm67 = vcmp.eq.f32.partialorder %v56, 0.0
    %v68 = vand.u32 %v56, 2147483648
    %v69 = vsel %vm67, %v68, %v66
    %v70 = vrsqrt.pop %v57
    %v71 = vmul.f32 %v70, %v57
    %v72 = vmul.f32 %v71, %v70
    %v73 = vmul.f32 0.5, %v72
    %v74 = vsub.f32 1.5, %v73
    %v75 = vmul.f32 %v70, %v74
    %v76 = vmul.f32 %v57, %v75
    %vm77 = vcmp.eq.f32.partialorder %v57, inf
    %v78 = vsel %vm77, %v57, %v76
    %vm79 = vcmp.eq.f32.partialorder %v57, 0.0
    %v80 = vand.u32 %v57, 2147483648
    %v81 = vsel %vm79, %v80, %v78
    %v82 = vadd.f32 %v69, %v81
    %83 = vadd.xlane.f32.xlu0 %v82
    %v84 = vpop.xlane.xlu0 %83
    %v85 = vmul.f32 %v84, 0.03125
    %v86 = vsub.f32 0.0, %v85
    %v87 = vmax.f32 %v86, -0.5
    %v88 = vmul.f32 %v87, 8.0
    %v89 = vadd.f32 %v88, 4.0
    %v90 = vmul.f32 %v9, 0.31815162
    %v91 = vmul.f32 %v10, 0.31815162
    %v92 = vadd.f32 %v90, 0.0
    %v93 = vadd.f32 %v91, 0.0
    %v94 = vmul.f32 %v11, 0.37528542
    %v95 = vmul.f32 %v12, 0.37528542
    %v98 = vrot.slane %v94, 3
    %v99 = vrot.slane %v95, 3
    %v102 = vadd.f32 %v92, %v98
    %v103 = vadd.f32 %v93, %v99
    %v106 = vrot.slane %v102, 5
    %v107 = vrot.slane %v103, 5
    %v110 = vmul.f32 %v9, %v106
    %v111 = vmul.f32 %v10, %v107
    %v112 = vmul.f32 %v110, %v110
    %v113 = vmul.f32 %v111, %v111
    %v114 = vadd.f32 %v112, 0.0
    %v115 = vadd.f32 %v113, 0.0
    %v116 = vmul.f32 %v9, 0.046990424
    %v117 = vmul.f32 %v10, 0.046990424
    %v118 = vadd.f32 %v116, 0.0
    %v119 = vadd.f32 %v117, 0.0
    %v120 = vmul.f32 %v9, 0.029130042
    %v121 = vmul.f32 %v10, 0.029130042
    %v124 = vrot.slane %v120, 1
    %v125 = vrot.slane %v121, 1
    %v128 = vadd.f32 %v118, %v124
    %v129 = vadd.f32 %v119, %v125
    %v130 = vmul.f32 %v9, 0.57032615
    %v131 = vmul.f32 %v10, 0.57032615
    %v134 = vrot.slane %v130, 3
    %v135 = vrot.slane %v131, 3
    %v138 = vadd.f32 %v128, %v134
    %v139 = vadd.f32 %v129, %v135
    %v140 = vmul.f32 %v11, 0.35355338
    %v141 = vmul.f32 %v12, 0.35355338
    %v144 = vrot.slane %v140, 4
    %v145 = vrot.slane %v141, 4
    %v148 = vadd.f32 %v138, %v144
    %v149 = vadd.f32 %v139, %v145
    %v152 = vrot.slane %v148, 3
    %v153 = vrot.slane %v149, 3
    %v156 = vmul.f32 %v9, %v152
    %v157 = vmul.f32 %v10, %v153
    %v158 = vmul.f32 %v156, %v156
    %v159 = vmul.f32 %v157, %v157
    %v162 = vrot.slane %v158, 1
    %v163 = vrot.slane %v159, 1
    %v166 = vadd.f32 %v114, %v162
    %v167 = vadd.f32 %v115, %v163
    %v168 = vmul.f32 %v9, 0.37528542
    %v169 = vmul.f32 %v10, 0.37528542
    %v170 = vadd.f32 %v168, 0.0
    %v171 = vadd.f32 %v169, 0.0
    %v174 = vrot.slane %v90, 1
    %v175 = vrot.slane %v91, 1
    %v178 = vadd.f32 %v170, %v174
    %v179 = vadd.f32 %v171, %v175
    %v182 = vrot.slane %v178, 4
    %v183 = vrot.slane %v179, 4
    %v186 = vmul.f32 %v9, %v182
    %v187 = vmul.f32 %v10, %v183
    %v188 = vmul.f32 %v186, %v186
    %v189 = vmul.f32 %v187, %v187
    %v192 = vrot.slane %v188, 2
    %v193 = vrot.slane %v189, 2
    %v196 = vadd.f32 %v166, %v192
    %v197 = vadd.f32 %v167, %v193
    %v198 = vadd.f32 %v120, 0.0
    %v199 = vadd.f32 %v121, 0.0
    %v200 = vmul.f32 %v9, 0.35355338
    %v201 = vmul.f32 %v10, 0.35355338
    %v204 = vrot.slane %v200, 1
    %v205 = vrot.slane %v201, 1
    %v208 = vadd.f32 %v198, %v204
    %v209 = vadd.f32 %v199, %v205
    %v212 = vrot.slane %v116, 3
    %v213 = vrot.slane %v117, 3
    %v216 = vadd.f32 %v208, %v212
    %v217 = vadd.f32 %v209, %v213
    %v218 = vrot.slane %v130, 4
    %v219 = vrot.slane %v131, 4
    %v222 = vadd.f32 %v216, %v218
    %v223 = vadd.f32 %v217, %v219
    %v226 = vrot.slane %v222, 6
    %v227 = vrot.slane %v223, 6
    %v230 = vmul.f32 %v9, %v226
    %v231 = vmul.f32 %v10, %v227
    %v232 = vmul.f32 %v230, %v230
    %v233 = vmul.f32 %v231, %v231
    %v236 = vrot.slane %v232, 3
    %v237 = vrot.slane %v233, 3
    %v240 = vadd.f32 %v196, %v236
    %v241 = vadd.f32 %v197, %v237
    %v242 = vadd.f32 %v9, 0.0
    %v243 = vadd.f32 %v10, 0.0
    %v244 = vmul.f32 %v9, %v242
    %v245 = vmul.f32 %v10, %v243
    %v246 = vmul.f32 %v244, %v244
    %v247 = vmul.f32 %v245, %v245
    %v250 = vrot.slane %v246, 4
    %v251 = vrot.slane %v247, 4
    %v254 = vadd.f32 %v240, %v250
    %v255 = vadd.f32 %v241, %v251
    %v256 = vadd.f32 %v130, 0.0
    %v257 = vadd.f32 %v131, 0.0
    %v258 = vrot.slane %v116, 1
    %v259 = vrot.slane %v117, 1
    %v262 = vadd.f32 %v256, %v258
    %v263 = vadd.f32 %v257, %v259
    %v264 = vrot.slane %v200, 3
    %v265 = vrot.slane %v201, 3
    %v268 = vadd.f32 %v262, %v264
    %v269 = vadd.f32 %v263, %v265
    %v270 = vrot.slane %v120, 4
    %v271 = vrot.slane %v121, 4
    %v274 = vadd.f32 %v268, %v270
    %v275 = vadd.f32 %v269, %v271
    %v278 = vrot.slane %v274, 6
    %v279 = vrot.slane %v275, 6
    %v282 = vmul.f32 %v9, %v278
    %v283 = vmul.f32 %v10, %v279
    %v284 = vmul.f32 %v282, %v282
    %v285 = vmul.f32 %v283, %v283
    %v288 = vrot.slane %v284, 5
    %v289 = vrot.slane %v285, 5
    %v292 = vadd.f32 %v254, %v288
    %v293 = vadd.f32 %v255, %v289
    %v296 = vrot.slane %v168, 1
    %v297 = vrot.slane %v169, 1
    %v300 = vadd.f32 %v92, %v296
    %v301 = vadd.f32 %v93, %v297
    %v304 = vrot.slane %v300, 3
    %v305 = vrot.slane %v301, 3
    %v308 = vmul.f32 %v9, %v304
    %v309 = vmul.f32 %v10, %v305
    %v310 = vmul.f32 %v308, %v308
    %v311 = vmul.f32 %v309, %v309
    %v314 = vrot.slane %v310, 6
    %v315 = vrot.slane %v311, 6
    %v318 = vadd.f32 %v292, %v314
    %v319 = vadd.f32 %v293, %v315
    %v320 = vadd.f32 %v200, 0.0
    %v321 = vadd.f32 %v201, 0.0
    %v322 = vrot.slane %v130, 1
    %v323 = vrot.slane %v131, 1
    %v326 = vadd.f32 %v320, %v322
    %v327 = vadd.f32 %v321, %v323
    %v328 = vrot.slane %v120, 3
    %v329 = vrot.slane %v121, 3
    %v332 = vadd.f32 %v326, %v328
    %v333 = vadd.f32 %v327, %v329
    %v334 = vrot.slane %v116, 4
    %v335 = vrot.slane %v117, 4
    %v338 = vadd.f32 %v332, %v334
    %v339 = vadd.f32 %v333, %v335
    %v342 = vrot.slane %v338, 1
    %v343 = vrot.slane %v339, 1
    %v346 = vmul.f32 %v9, %v342
    %v347 = vmul.f32 %v10, %v343
    %v348 = vmul.f32 %v346, %v346
    %v349 = vmul.f32 %v347, %v347
    %v352 = vrot.slane %v348, 7
    %v353 = vrot.slane %v349, 7
    %v356 = vadd.f32 %v318, %v352
    %v357 = vadd.f32 %v319, %v353
    %v358 = vrot.slane %v90, 3
    %v359 = vrot.slane %v91, 3
    %v362 = vadd.f32 %v170, %v358
    %v363 = vadd.f32 %v171, %v359
    %v364 = vmul.f32 %v11, %v362
    %v365 = vmul.f32 %v12, %v363
    %v366 = vmul.f32 %v364, %v364
    %v367 = vmul.f32 %v365, %v365
    %v368 = vadd.f32 %v356, %v366
    %v369 = vadd.f32 %v357, %v367
    %v370 = vsel %vm13, %v368, 0.0
    %v371 = vsel %vm13, %v369, 0.0
    %v372 = vadd.f32 %v370, %v371
    %373 = vadd.xlane.f32.xlu0 %v372
    %v374 = vpop.xlane.xlu0 %373
    %v375 = vmul.f32 %v9, %v10
    %v376 = vmul.f32 %v11, %v12
    %v377 = vmul.f32 %v375, %v375
    %v378 = vmul.f32 %v376, %v376
    %v379 = vsel %vm13, %v378, 0.0
    %v380 = vadd.f32 %v377, %v379
    %v381 = vrot.slane %v380, 4
    %v382 = vadd.f32 %v380, %v381
    %v383 = vrot.slane %v382, 2
    %v384 = vadd.f32 %v382, %v383
    %v385 = vrot.slane %v384, 1
    %v386 = vadd.f32 %v384, %v385
    %387 = vadd.xlane.f32.xlu0 %v386
    %v388 = vpop.xlane.xlu0 %387
    %v389 = vmul.f32 %v388, 2.0
    %v390 = vrsqrt.pop %v374
    %v391 = vmul.f32 %v390, %v374
    %v392 = vmul.f32 %v391, %v390
    %v393 = vmul.f32 0.5, %v392
    %v394 = vsub.f32 1.5, %v393
    %v395 = vmul.f32 %v390, %v394
    %v396 = vmul.f32 %v374, %v395
    %vm397 = vcmp.eq.f32.partialorder %v374, inf
    %v398 = vsel %vm397, %v374, %v396
    %vm399 = vcmp.eq.f32.partialorder %v374, 0.0
    %v400 = vand.u32 %v374, 2147483648
    %v401 = vsel %vm399, %v400, %v398
    %v402 = vrsqrt.pop %v389
    %v403 = vmul.f32 %v402, %v389
    %v404 = vmul.f32 %v403, %v402
    %v405 = vmul.f32 0.5, %v404
    %v406 = vsub.f32 1.5, %v405
    %v407 = vmul.f32 %v402, %v406
    %v408 = vmul.f32 %v389, %v407
    %vm409 = vcmp.eq.f32.partialorder %v389, inf
    %v410 = vsel %vm409, %v389, %v408
    %vm411 = vcmp.eq.f32.partialorder %v389, 0.0
    %v412 = vand.u32 %v389, 2147483648
    %v413 = vsel %vm411, %v412, %v410
    %v414 = vadd.f32 %v401, %v413
    %v415 = vadd.f32 %v414, 1e-06
    %v416 = vrcp.pop %v415
    %v417 = vmul.f32 %v415, %v416
    %v418 = vsub.f32 1.0, %v417
    %v419 = vmul.f32 %v416, %v418
    %v420 = vadd.f32 %v416, %v419
    %vm421 = vweird.f32 %v415
    %vm422 = vweird.f32 %v416
    %vm423 = vmor %vm421, %vm422
    %v424 = vsel %vm423, %v416, %v420
    %v425 = vand.u32 2147483647, %v415
    %vm426 = vcmp.eq.f32.partialorder %v425, 8.507059e+37
    %v427 = vand.u32 %v415, 2147483648
    %v428 = vor.u32 1.1754944e-38, %v427
    %v429 = vsel %vm426, %v428, %v424
    %v430 = vmul.f32 %v413, %v429
    %v431 = vadd.f32 %v430, %v89
    %vm432 = vcmask 0
    %433 = vst.msk [vmem:[#allocation2] sm:$0x1] %vm432, %v431
    // Predicated region
    $region6: #{rotation_forward.1} parent=1 // pred_check
      _
    $region7: #{rotation_forward.1} parent=1 // pred_check_branch
      %435 = sbr.rel (0) target = $region9
    $region8: #{rotation_forward.1} parent=1 // pred_region
      %437 = vsyncadd [#allocation3], 0
      %s439 = sshll.u32 [#allocation2], 4
      %s440 = int_to_ptr.vmem [resolvable:$true] %s439
      %s441 = sshll.u32 %s1, 4
      %s442 = int_to_ptr.hbm [resolvable:$true] %s441
      %444 = dma.vmem_to_hbm [thread:$0]  %s440, 16, %s442, [#allocation3]
    $region9: #{rotation_forward.1} parent=1 // pred_fallthru
      _
    // Predicated region
    $region10: #{rotation_forward.1} parent=1 // pred_check
      _
    $region11: #{rotation_forward.1} parent=1 // pred_check_branch
      %446 = sbr.rel (0) target = $region13
    $region12: #{rotation_forward.1} parent=1 // pred_region
      %448 = dma.done [#allocation3], 16
    $region13: #{rotation_forward.1} parent=1 // pred_fallthru
      _
    %449 = vsyncpa [#allocation3], 1

</llo_original>
